<compile_context>
chip_gen: v7x
topology: tpu7x:2x2x1
jax: 0.10.0
libtpu: 0.0.40
codegen_flags: <defaults>
</compile_context>

<pallas_src>
import functools

import jax
import jax.numpy as jnp
from jax.experimental import pallas as pl
from jax.experimental.pallas import tpu as pltpu


def _signet_kernel(x_ref, w_ref, out_ref):
    # x_ref: (TB, F) VMEM tile of the batch, w_ref: (1, F) resident weight row.
    x = x_ref[...].astype(jnp.float32)
    w = w_ref[...].astype(jnp.float32)

    # Linear (no bias), contraction over features: VPU multiply + XLU lane reduce.
    # Avoids an N=1 MXU matvec and the per-step (1,F) transpose of w.
    logits = jnp.sum(x * w, axis=-1, keepdims=True)  # (TB, 1) float32

    # sigmoid(z) = 1 / (1 + exp(-z)); exp and approx reciprocal both run on the EUP.
    sig = pl.reciprocal(1.0 + jnp.exp(-logits), approx=True)
    out_ref[...] = sig.astype(out_ref.dtype)


def signet_forward(x, w, *, tb=512):
    """x: [B, F] float32, w: [1, F] float32.

    Returns (sigmoid(x @ w.T) with shape [B, 1], feature_relevances with shape [F]).
    """
    B, F = x.shape
    assert w.shape == (1, F)

    # featureSelection(): mean(|W|, axis=0) over a size-1 hidden dim == |W|.
    # Trivial, leave it to XLA (it fuses for free) instead of an extra kernel output.
    feature_relevances = jnp.abs(w)[0]

    # Tiny problems: a pallas_call's fixed overhead dominates; let XLA fuse it.
    if B < 64 or F < 128:
        return jax.nn.sigmoid(x @ w.T), feature_relevances

    # Pick the batch tile: cap so double-buffered x tiles (+ w + out) stay well
    # inside the scoped-VMEM budget on every generation (incl. v7x's 64 MiB VMEM).
    vmem_budget = 24 * 1024 * 1024          # headroom below the 32 MiB limit below
    bytes_per_row = F * 4
    max_tb = max(8, ((vmem_budget // (2 * bytes_per_row)) // 8) * 8)
    tb = min(tb, max_tb)
    if B <= tb:
        tb = B                              # full-extent block is always legal
    else:
        tb = max(8, (tb // 8) * 8)          # keep (8, 128) tiling rule happy

    grid = (pl.cdiv(B, tb),)

    x1 = pl.pallas_call(
        _signet_kernel,
        out_shape=jax.ShapeDtypeStruct((B, 1), jnp.float32),
        grid=grid,
        in_specs=[
            pl.BlockSpec((tb, F), lambda i: (i, 0)),   # stream batch tiles
            pl.BlockSpec((1, F), lambda i: (0, 0)),    # w resident: same block every step
        ],
        out_specs=pl.BlockSpec((tb, 1), lambda i: (i, 0)),
        compiler_params=pltpu.CompilerParams(
            dimension_semantics=("parallel",),          # independent batch tiles (2 TCs on v7x)
            vmem_limit_bytes=32 * 1024 * 1024,
        ),
    )(x, w)

    return x1, feature_relevances


if __name__ == "__main__":
    key = jax.random.PRNGKey(0)
    k_x, k_w = jax.random.split(key)

    # Small but tile-friendly shapes: batch=256 rows, input_size=128 features.
    B, F = 256, 128

    x = jax.random.normal(k_x, (B, F), dtype=jnp.float32)
    # torch.nn.init.normal(weight, 0, 1e-5) equivalent, deterministic.
    w = 1e-5 * jax.random.normal(k_w, (1, F), dtype=jnp.float32)

    # tb=128 -> grid=(2,): exercises batch tiling + resident weight.
    run = jax.jit(functools.partial(signet_forward, tb=128))
    x1, feature_relevances = run(x, w)
    jax.block_until_ready((x1, feature_relevances))

    # Reference check in plain JAX.
    ref = jax.nn.sigmoid(x @ w.T)
    ref_rel = jnp.abs(w)[0]
    assert x1.shape == (B, 1)
    assert jnp.allclose(x1, ref, atol=2e-3), "forward mismatch"          # approx reciprocal tol
    assert jnp.allclose(feature_relevances, ref_rel), "relevance mismatch"

    # TODO(synk): grow() (dynamic weight resizing when len(x) > input_size) is
    # Python-side module mutation; it is a no-op for matching sizes and is left out.
    print("KERNEL_OK")
</pallas_src>

<mosaic_0001>
module attributes {stable_mosaic.version = 11 : i64} {
  func.func @_signet_kernel(%arg0: i32, %arg1: memref<128x128xf32, #tpu.memory_space<vmem>>, %arg2: memref<1x128xf32, #tpu.memory_space<vmem>>, %arg3: memref<128x1xf32, #tpu.memory_space<vmem>>) attributes {dimension_semantics = [#tpu.dimension_semantics<parallel>], iteration_bounds = array<i64: 2>, scalar_prefetch = 0 : i64, scratch_operands = 0 : i64, tpu.core_type = #tpu.core_type<tc>, window_params = [{transform_indices = @transform_0, window_bounds = array<i64: 128, 128>}, {pipeline_mode = #tpu.pipeline_mode<synchronous>, transform_indices = @transform_1, window_bounds = array<i64: 1, 128>}, {transform_indices = @transform_2, window_bounds = array<i64: 128, 1>}]} {
    %c0 = arith.constant 0 : index
    %c0_0 = arith.constant 0 : index
    %0 = vector.load %arg1[%c0, %c0_0] : memref<128x128xf32, #tpu.memory_space<vmem>>, vector<128x128xf32>
    %c0_1 = arith.constant 0 : index
    %c0_2 = arith.constant 0 : index
    %1 = vector.load %arg2[%c0_1, %c0_2] : memref<1x128xf32, #tpu.memory_space<vmem>>, vector<1x128xf32>
    %2 = vector.broadcast %1 : vector<1x128xf32> to vector<128x128xf32>
    %3 = arith.mulf %0, %2 : vector<128x128xf32>
    %cst = arith.constant dense<0.000000e+00> : vector<128xf32>
    %4 = vector.multi_reduction <add>, %3, %cst [1] : vector<128x128xf32> to vector<128xf32>
    %5 = vector.shape_cast %4 : vector<128xf32> to vector<128x1xf32>
    %cst_3 = arith.constant 0.000000e+00 : f32
    %6 = vector.broadcast %cst_3 : f32 to vector<128x1xf32>
    %7 = arith.subf %6, %5 : vector<128x1xf32>
    %8 = math.exp %7 : vector<128x1xf32>
    %cst_4 = arith.constant 1.000000e+00 : f32
    %9 = vector.broadcast %cst_4 : f32 to vector<128x1xf32>
    %10 = arith.addf %9, %8 : vector<128x1xf32>
    %11 = tpu.reciprocal %10 {approx = true} : vector<128x1xf32> -> vector<128x1xf32>
    %c0_5 = arith.constant 0 : index
    %c0_6 = arith.constant 0 : index
    %12 = vector.load %arg3[%c0_5, %c0_6] : memref<128x1xf32, #tpu.memory_space<vmem>>, vector<128x1xf32>
    tpu.vector_store %arg3[%c0_5, %c0_6], %11 {strides = array<i32>} : memref<128x1xf32, #tpu.memory_space<vmem>>, vector<128x1xf32>,
    return
  }
  func.func @transform_0(%arg0: i32) -> (i32, i32) {
    %c0_i32 = arith.constant 0 : i32
    %c0_i32_0 = arith.constant 0 : i32
    return %arg0, %c0_i32 : i32, i32
  }
  func.func @transform_1(%arg0: i32) -> (i32, i32) {
    %c0_i32 = arith.constant 0 : i32
    %c0_i32_0 = arith.constant 0 : i32
    %c0_i32_1 = arith.constant 0 : i32
    return %c0_i32, %c0_i32_0 : i32, i32
  }
  func.func @transform_2(%arg0: i32) -> (i32, i32) {
    %c0_i32 = arith.constant 0 : i32
    %c0_i32_0 = arith.constant 0 : i32
    return %arg0, %c0_i32 : i32, i32
  }
}

</mosaic_0001>

<llo_original>
// kernel: signet_forward.1
$region0: #{signet_forward.1}
  #allocation0 [shape = 'u32[]', space=smem, size = 0x4, offset = 0x4, fixed_abs, tag = 'smem constant byte address 0x4 - core index']
  #allocation1 [shape = 'u32[144,128]{1,0:T(1,128)}', space=vmem, size = 0x12000, scoped, tag = 'internal scratch']
  %s0 = inlined_call_operand.hbm [shape: f32[256,128], index: 0, kind: input, shape index: {}]
  %s1 = inlined_call_operand.vmem [shape: f32[1,128], index: 1, kind: input, shape index: {}]
  %s2 = inlined_call_operand.vmem [shape: f32[256,1], index: 2, kind: output, shape index: {}]
  %s3 = sld [smem:[#allocation0]]
  $region45: #{signet_forward.1} parent=0
    _
  %s5 = ssub.s32 1, %s3
  %s6 = scalar_select 0, %s5, %s3
  $region1: #{signet_forward.1} parent=0
    #allocation2 [shape = 'u8[131072]{0}', space=vmem, size = 0x20000, scoped, tag = 'input window, operand 0']
    #allocation3 [shape = 's32[2]{0}', space=sflag, size = 0x8, scoped, tag = 'scoped memory for signet_forward.1']
    %7 = vsyncpa [#allocation3], 0
    %s8 = scalar_lea.sflag [#allocation3], 1
    %9 = vsyncpa %s8, 0
    loop: start=0, step=1, limit=4
    $region2: #{signet_forward.1} parent=1 // loop_pre_header
      _
    $region3: #{signet_forward.1} parent=1 // loop_header
      %s11 = sphi 0, %s15
      %p12 = scmp.ge.s32.totalorder %s11, 4
      %s21 = sphi 0, %s23
      %s24 = sphi 0, %s21
      %s25 = sphi 0, %s24
      %s41 = sphi 0, %s25
      %s45 = sphi 0, %s45
      %s47 = sphi 0, %s45
      %s48 = sphi 0, %s47
      %s62 = sphi 0, %s48
      %s68 = sphi 0, %s70
      %s71 = sphi 0, %s68
      %s72 = sphi 0, %s71
      %s88 = sphi 0, %s72
    $region4: #{signet_forward.1} parent=1 // loop_header_branch
      %14 = sbr.rel (%p12) target = $region8
    $region5: #{signet_forward.1} parent=1 // loop_body
      %s16 = ssub.s32 %s11, 1
      %s17 = ssub.s32 %s11, 2
      %s18 = sadd.s32 %s11, 1
      %s19 = ssub.s32 %s11, %s18
      %p20 = scmp.eq.s32.totalorder %s19, 0
      %s22 = sadd.s32 %s21, 1
      %s23 = scalar_select %p20, %s21, %s22
      %p26 = pneg %p20
      %p27 = scmp.eq.s32.totalorder %s11, 1
      %p28 = por %p26, %p27
      %p29 = scmp.ne.s32.totalorder %s21, %s24
      %p30 = scmp.eq.s32.totalorder %s11, 0
      %p31 = por %p29, %p30
      %p32 = scmp.ne.s32.totalorder %s21, %s24
      %p33 = scmp.eq.s32.totalorder %s16, 1
      %p34 = por %p32, %p33
      %p35 = scmp.ne.s32.totalorder %s24, %s25
      %p36 = scmp.eq.s32.totalorder %s16, 0
      %p37 = por %p35, %p36
      %p38 = scmp.ne.s32.totalorder %s24, %s25
      %p39 = scmp.eq.s32.totalorder %s17, 1
      %p40 = por %p38, %p39
      %p42 = scmp.ne.s32.totalorder %s25, %s41
      %p43 = scmp.eq.s32.totalorder %s17, 0
      %p44 = por %p42, %p43
      %s46 = sadd.s32 %s45, 1
      %p49 = scmp.eq.s32.totalorder %s11, 1
      %p50 = scmp.ne.s32.totalorder %s45, %s47
      %p51 = scmp.eq.s32.totalorder %s11, 0
      %p52 = por %p50, %p51
      %p53 = scmp.ne.s32.totalorder %s45, %s47
      %p54 = scmp.eq.s32.totalorder %s16, 1
      %p55 = por %p53, %p54
      %p56 = scmp.ne.s32.totalorder %s47, %s48
      %p57 = scmp.eq.s32.totalorder %s16, 0
      %p58 = por %p56, %p57
      %p59 = scmp.ne.s32.totalorder %s47, %s48
      %p60 = scmp.eq.s32.totalorder %s17, 1
      %p61 = por %p59, %p60
      %p63 = scmp.ne.s32.totalorder %s48, %s62
      %p64 = scmp.eq.s32.totalorder %s17, 0
      %p65 = por %p63, %p64
      %s66 = ssub.s32 %s11, %s18
      %p67 = scmp.eq.s32.totalorder %s66, 0
      %s69 = sadd.s32 %s68, 1
      %s70 = scalar_select %p67, %s68, %s69
      %p73 = pneg %p67
      %p74 = scmp.eq.s32.totalorder %s11, 1
      %p75 = por %p73, %p74
      %p76 = scmp.ne.s32.totalorder %s68, %s71
      %p77 = scmp.eq.s32.totalorder %s11, 0
      %p78 = por %p76, %p77
      %p79 = scmp.ne.s32.totalorder %s68, %s71
      %p80 = scmp.eq.s32.totalorder %s16, 1
      %p81 = por %p79, %p80
      %p82 = scmp.ne.s32.totalorder %s71, %s72
      %p83 = scmp.eq.s32.totalorder %s16, 0
      %p84 = por %p82, %p83
      %p85 = scmp.ne.s32.totalorder %s71, %s72
      %p86 = scmp.eq.s32.totalorder %s17, 1
      %p87 = por %p85, %p86
      %p89 = scmp.ne.s32.totalorder %s72, %s88
      %p90 = scmp.eq.s32.totalorder %s17, 0
      %p91 = por %p89, %p90
      %p92 = scmp.le.s32.totalorder 1, %s11
      %p93 = scmp.lt.s32.totalorder %s11, 3
      %p94 = pnand %p92, %p93
      %p95 = pneg %p94
      // Predicated region
      $region9: #{signet_forward.1} parent=5 // pred_check
        _
      $region10: #{signet_forward.1} parent=5 // pred_check_branch
        %97 = sbr.rel (%p94) target = $region12
      $region11: #{signet_forward.1} parent=5 // pred_region
        %s98 = ssub.s32 %s11, 1
        // Predicated region
        $region13: #{signet_forward.1} parent=11 // pred_check
          %p99 = pneg %p58
        $region14: #{signet_forward.1} parent=11 // pred_check_branch
          %101 = sbr.rel (%p99) target = $region16
        $region15: #{signet_forward.1} parent=11 // pred_region
          _
        $region16: #{signet_forward.1} parent=11 // pred_fallthru
          _
      $region12: #{signet_forward.1} parent=5 // pred_fallthru
        _
      %p102 = scmp.lt.s32.totalorder %s11, 2
      // Predicated region
      $region17: #{signet_forward.1} parent=5 // pred_check
        %p103 = pneg %p102
      $region18: #{signet_forward.1} parent=5 // pred_check_branch
        %105 = sbr.rel (%p103) target = $region20
      $region19: #{signet_forward.1} parent=5 // pred_region
        // Predicated region
        $region21: #{signet_forward.1} parent=19 // pred_check
          %p106 = pneg %p31
        $region22: #{signet_forward.1} parent=19 // pred_check_branch
          %108 = sbr.rel (%p106) target = $region24
        $region23: #{signet_forward.1} parent=19 // pred_region
          %s109 = sand.u32 %s21, 1
          %s110 = scalar_lea.sflag [#allocation3], %s109
          %s111 = sand.u32 %s21, 1
          %s112 = smul.addr %s111, 128
          %s113 = scalar_lea.vmem [#allocation2], %s112
          %s114 = smul.u32 16, %s11
          %s116 = ssub.s32 2048, 2048
          %117 = vsyncadd %s110, %s116
          %s118 = smul.addr %s114, 128
          %s119 = scalar_lea.hbm %s0, %s118
          %s120 = sshll.u32 %s113, 4
          %s121 = int_to_ptr.vmem [resolvable:$true] %s120
          %126 = dma.hbm_to_vmem [thread:$0]  %s119, 2048, %s121, %s110, 128, 128, 8
        $region24: #{signet_forward.1} parent=19 // pred_fallthru
          _
      $region20: #{signet_forward.1} parent=5 // pred_fallthru
        _
      %p127 = scmp.le.s32.totalorder 1, %s11
      %p128 = scmp.lt.s32.totalorder %s11, 3
      %p129 = pnand %p127, %p128
      %p130 = pneg %p129
      // Predicated region
      $region25: #{signet_forward.1} parent=5 // pred_check
        _
      $region26: #{signet_forward.1} parent=5 // pred_check_branch
        %132 = sbr.rel (%p129) target = $region28
      $region27: #{signet_forward.1} parent=5 // pred_region
        %s133 = ssub.s32 %s11, 1
        %s134 = sand.u32 %s24, 1
        %s135 = scalar_lea.sflag [#allocation3], %s134
        %s136 = sand.u32 %s24, 1
        %s137 = smul.addr %s136, 128
        %s138 = scalar_lea.vmem [#allocation2], %s137
        // Predicated region
        $region29: #{signet_forward.1} parent=27 // pred_check
          %p139 = pneg %p37
        $region30: #{signet_forward.1} parent=27 // pred_check_branch
          %141 = sbr.rel (%p139) target = $region32
        $region31: #{signet_forward.1} parent=27 // pred_region
          %142 = dma.done %s135, 2048
        $region32: #{signet_forward.1} parent=27 // pred_fallthru
          _
        %s143 = sand.u32 %s24, 1
        %s144 = scalar_lea.sflag [#allocation3], %s143
        %s145 = sand.u32 %s24, 1
        %s146 = smul.addr %s145, 128
        %s147 = scalar_lea.vmem [#allocation2], %s146
        %p148 = pneg %p37
        %p149 = pneg %p34
        %p150 = pneg %p58
        %p151 = pneg %p55
        %p152 = pneg %p84
        %p153 = pneg %p81
        %s154 = smul.u32 16, %s16
        %p155 = scmp.lt.s32.totalorder %s154, 31
        %s156 = scalar_select %p155, %s154, 31
        %s157 = smul.addr %s156, 8
        %s158 = scalar_lea.vmem %s2, %s157
        %s159 = smul.u32 16, %s16
        %s160 = smul.u32 16, %s16
        %p161 = scmp.lt.s32.totalorder %s160, 31
        %s162 = scalar_select %p161, %s160, 31
        %s163 = smul.addr %s162, 8
        %s164 = scalar_lea.vmem %s2, %s163
        %s165 = smul.u32 16, %s16
        %v166 = vld [vmem:[%s138] sm:$0xff]
        %v167 = vld [vmem:[%s138 + $0x8] sm:$0xff]
        %v168 = vld [vmem:[%s138 + $0x10] sm:$0xff]
        %v169 = vld [vmem:[%s138 + $0x18] sm:$0xff]
        %v170 = vld [vmem:[%s138 + $0x20] sm:$0xff]
        %v171 = vld [vmem:[%s138 + $0x28] sm:$0xff]
        %v172 = vld [vmem:[%s138 + $0x30] sm:$0xff]
        %v173 = vld [vmem:[%s138 + $0x38] sm:$0xff]
        %v174 = vld [vmem:[%s138 + $0x40] sm:$0xff]
        %v175 = vld [vmem:[%s138 + $0x48] sm:$0xff]
        %v176 = vld [vmem:[%s138 + $0x50] sm:$0xff]
        %v177 = vld [vmem:[%s138 + $0x58] sm:$0xff]
        %v178 = vld [vmem:[%s138 + $0x60] sm:$0xff]
        %v179 = vld [vmem:[%s138 + $0x68] sm:$0xff]
        %v180 = vld [vmem:[%s138 + $0x70] sm:$0xff]
        %v181 = vld [vmem:[%s138 + $0x78] sm:$0xff]
        %v182 = vld [vmem:[%s1] sm:$0x1]
        %v184 = vlaneseq
        %v185 = vshrl.u32 %v184, 7
        %v186 = vsub.s32 0, %v185
        %v187 = vrot.slane %v182, %v186
        %v189 = vmul.f32 %v166, %v187
        %v190 = vmul.f32 %v167, %v187
        %v191 = vmul.f32 %v168, %v187
        %v192 = vmul.f32 %v169, %v187
        %v193 = vmul.f32 %v170, %v187
        %v194 = vmul.f32 %v171, %v187
        %v195 = vmul.f32 %v172, %v187
        %v196 = vmul.f32 %v173, %v187
        %v197 = vmul.f32 %v174, %v187
        %v198 = vmul.f32 %v175, %v187
        %v199 = vmul.f32 %v176, %v187
        %v200 = vmul.f32 %v177, %v187
        %v201 = vmul.f32 %v178, %v187
        %v202 = vmul.f32 %v179, %v187
        %v203 = vmul.f32 %v180, %v187
        %v204 = vmul.f32 %v181, %v187
        %205 = vadd.xlane.f32.xlu0 %v189
        %v206 = vpop.xlane.xlu0 %205
        %207 = vadd.xlane.f32.xlu0 %v190
        %v208 = vpop.xlane.xlu0 %207
        %209 = vadd.xlane.f32.xlu0 %v191
        %v210 = vpop.xlane.xlu0 %209
        %211 = vadd.xlane.f32.xlu0 %v192
        %v212 = vpop.xlane.xlu0 %211
        %213 = vadd.xlane.f32.xlu0 %v193
        %v214 = vpop.xlane.xlu0 %213
        %215 = vadd.xlane.f32.xlu0 %v194
        %v216 = vpop.xlane.xlu0 %215
        %217 = vadd.xlane.f32.xlu0 %v195
        %v218 = vpop.xlane.xlu0 %217
        %219 = vadd.xlane.f32.xlu0 %v196
        %v220 = vpop.xlane.xlu0 %219
        %221 = vadd.xlane.f32.xlu0 %v197
        %v222 = vpop.xlane.xlu0 %221
        %223 = vadd.xlane.f32.xlu0 %v198
        %v224 = vpop.xlane.xlu0 %223
        %225 = vadd.xlane.f32.xlu0 %v199
        %v226 = vpop.xlane.xlu0 %225
        %227 = vadd.xlane.f32.xlu0 %v200
        %v228 = vpop.xlane.xlu0 %227
        %229 = vadd.xlane.f32.xlu0 %v201
        %v230 = vpop.xlane.xlu0 %229
        %231 = vadd.xlane.f32.xlu0 %v202
        %v232 = vpop.xlane.xlu0 %231
        %233 = vadd.xlane.f32.xlu0 %v203
        %v234 = vpop.xlane.xlu0 %233
        %235 = vadd.xlane.f32.xlu0 %v204
        %v236 = vpop.xlane.xlu0 %235
        %v237 = vsub.f32 0.0, %v206
        %v238 = vsub.f32 0.0, %v208
        %v239 = vsub.f32 0.0, %v210
        %v240 = vsub.f32 0.0, %v212
        %v241 = vsub.f32 0.0, %v214
        %v242 = vsub.f32 0.0, %v216
        %v243 = vsub.f32 0.0, %v218
        %v244 = vsub.f32 0.0, %v220
        %v245 = vsub.f32 0.0, %v222
        %v246 = vsub.f32 0.0, %v224
        %v247 = vsub.f32 0.0, %v226
        %v248 = vsub.f32 0.0, %v228
        %v249 = vsub.f32 0.0, %v230
        %v250 = vsub.f32 0.0, %v232
        %v251 = vsub.f32 0.0, %v234
        %v252 = vsub.f32 0.0, %v236
        %v253 = vmul.f32 %v237, 1.442695
        %v254 = vpow.pop %v253
        %v255 = vmul.f32 %v238, 1.442695
        %v256 = vpow.pop %v255
        %v257 = vmul.f32 %v239, 1.442695
        %v258 = vpow.pop %v257
        %v259 = vmul.f32 %v240, 1.442695
        %v260 = vpow.pop %v259
        %v261 = vmul.f32 %v241, 1.442695
        %v262 = vpow.pop %v261
        %v263 = vmul.f32 %v242, 1.442695
        %v264 = vpow.pop %v263
        %v265 = vmul.f32 %v243, 1.442695
        %v266 = vpow.pop %v265
        %v267 = vmul.f32 %v244, 1.442695
        %v268 = vpow.pop %v267
        %v269 = vmul.f32 %v245, 1.442695
        %v270 = vpow.pop %v269
        %v271 = vmul.f32 %v246, 1.442695
        %v272 = vpow.pop %v271
        %v273 = vmul.f32 %v247, 1.442695
        %v274 = vpow.pop %v273
        %v275 = vmul.f32 %v248, 1.442695
        %v276 = vpow.pop %v275
        %v277 = vmul.f32 %v249, 1.442695
        %v278 = vpow.pop %v277
        %v279 = vmul.f32 %v250, 1.442695
        %v280 = vpow.pop %v279
        %v281 = vmul.f32 %v251, 1.442695
        %v282 = vpow.pop %v281
        %v283 = vmul.f32 %v252, 1.442695
        %v284 = vpow.pop %v283
        %v285 = vadd.f32 %v254, 1.0
        %v286 = vadd.f32 %v256, 1.0
        %v287 = vadd.f32 %v258, 1.0
        %v288 = vadd.f32 %v260, 1.0
        %v289 = vadd.f32 %v262, 1.0
        %v290 = vadd.f32 %v264, 1.0
        %v291 = vadd.f32 %v266, 1.0
        %v292 = vadd.f32 %v268, 1.0
        %v293 = vadd.f32 %v270, 1.0
        %v294 = vadd.f32 %v272, 1.0
        %v295 = vadd.f32 %v274, 1.0
        %v296 = vadd.f32 %v276, 1.0
        %v297 = vadd.f32 %v278, 1.0
        %v298 = vadd.f32 %v280, 1.0
        %v299 = vadd.f32 %v282, 1.0
        %v300 = vadd.f32 %v284, 1.0
        %v301 = vrcp.pop %v285
        %v302 = vrcp.pop %v286
        %v303 = vrcp.pop %v287
        %v304 = vrcp.pop %v288
        %v305 = vrcp.pop %v289
        %v306 = vrcp.pop %v290
        %v307 = vrcp.pop %v291
        %v308 = vrcp.pop %v292
        %v309 = vrcp.pop %v293
        %v310 = vrcp.pop %v294
        %v311 = vrcp.pop %v295
        %v312 = vrcp.pop %v296
        %v313 = vrcp.pop %v297
        %v314 = vrcp.pop %v298
        %v315 = vrcp.pop %v299
        %v316 = vrcp.pop %v300
        %vm317 = vcmask 7168
        %318 = vst.msk [vmem:[%s164] sm:$0xff] %vm317, %v301
        %319 = vst.msk [vmem:[%s164 + $0x8] sm:$0xff] %vm317, %v302
        %320 = vst.msk [vmem:[%s164 + $0x10] sm:$0xff] %vm317, %v303
        %321 = vst.msk [vmem:[%s164 + $0x18] sm:$0xff] %vm317, %v304
        %322 = vst.msk [vmem:[%s164 + $0x20] sm:$0xff] %vm317, %v305
        %323 = vst.msk [vmem:[%s164 + $0x28] sm:$0xff] %vm317, %v306
        %324 = vst.msk [vmem:[%s164 + $0x30] sm:$0xff] %vm317, %v307
        %325 = vst.msk [vmem:[%s164 + $0x38] sm:$0xff] %vm317, %v308
        %326 = vst.msk [vmem:[%s164 + $0x40] sm:$0xff] %vm317, %v309
        %327 = vst.msk [vmem:[%s164 + $0x48] sm:$0xff] %vm317, %v310
        %328 = vst.msk [vmem:[%s164 + $0x50] sm:$0xff] %vm317, %v311
        %329 = vst.msk [vmem:[%s164 + $0x58] sm:$0xff] %vm317, %v312
        %330 = vst.msk [vmem:[%s164 + $0x60] sm:$0xff] %vm317, %v313
        %331 = vst.msk [vmem:[%s164 + $0x68] sm:$0xff] %vm317, %v314
        %332 = vst.msk [vmem:[%s164 + $0x70] sm:$0xff] %vm317, %v315
        %333 = vst.msk [vmem:[%s164 + $0x78] sm:$0xff] %vm317, %v316
        %s334 = smul.u32 16, %s16
        %p335 = scmp.lt.s32.totalorder %s334, 31
        %s336 = scalar_select %p335, %s334, 31
        %s337 = smul.addr %s336, 8
        %s338 = scalar_lea.vmem %s2, %s337
        // Predicated region
        $region33: #{signet_forward.1} parent=27 // pred_check
          %p339 = pneg %p81
        $region34: #{signet_forward.1} parent=27 // pred_check_branch
          %341 = sbr.rel (%p339) target = $region36
        $region35: #{signet_forward.1} parent=27 // pred_region
          %s342 = smul.u32 16, %s16
        $region36: #{signet_forward.1} parent=27 // pred_fallthru
          _
      $region28: #{signet_forward.1} parent=5 // pred_fallthru
        _
      %p343 = scmp.le.s32.totalorder 2, %s11
      // Predicated region
      $region37: #{signet_forward.1} parent=5 // pred_check
        %p344 = pneg %p343
      $region38: #{signet_forward.1} parent=5 // pred_check_branch
        %346 = sbr.rel (%p344) target = $region40
      $region39: #{signet_forward.1} parent=5 // pred_region
        %s347 = ssub.s32 %s11, 2
        // Predicated region
        $region41: #{signet_forward.1} parent=39 // pred_check
          %p348 = pneg %p87
        $region42: #{signet_forward.1} parent=39 // pred_check_branch
          %350 = sbr.rel (%p348) target = $region44
        $region43: #{signet_forward.1} parent=39 // pred_region
          %s351 = smul.u32 16, %s17
          %p352 = scmp.lt.s32.totalorder %s351, 31
          %s353 = scalar_select %p352, %s351, 31
          %s354 = smul.addr %s353, 8
          %s355 = scalar_lea.vmem %s2, %s354
        $region44: #{signet_forward.1} parent=39 // pred_fallthru
          _
      $region40: #{signet_forward.1} parent=5 // pred_fallthru
        _
    $region6: #{signet_forward.1} parent=1 // loop_footer
      %s15 = sadd.s32 1, %s11
    $region7: #{signet_forward.1} parent=1 // loop_footer_branch
      %10 = sbr.rel target = $region3
    $region8: #{signet_forward.1} parent=1 // loop_exit
      _
    %356 = vsyncpa [#allocation3], 1
    %s357 = scalar_lea.sflag [#allocation3], 1
    %358 = vsyncpa %s357, 1

</llo_original>
